<compile_context>
chip_gen: v5e
topology: v5e:2x2
jax: 0.10.0
libtpu: 0.0.40
codegen_flags: <defaults>
</compile_context>

<pallas_src>
import jax
import jax.numpy as jnp
from jax.experimental import pallas as pl
from jax.experimental.pallas import tpu as pltpu


def _round_up(x, m):
    return ((x + m - 1) // m) * m


def review_classifier_kernel(xT_ref, w1f_ref, w2_ref, pack_ref, out_ref):
    # xT_ref  : (K, Bt)    K = vocab + F + 1; rows = [counts | numeric | ones]
    # w1f_ref : (128, K)   fused fc1 weight (embedding/S folded in, last col = b1)
    # w2_ref  : (64, 128)  fc2 weight (transposed)
    # pack_ref: (64, 3)    col0 = b2, col1 = fc3 weight, col2 = b3 (broadcast)
    # out_ref : (8, Bt)    lane-packed sigmoid, identical rows (sublane-broadcast store)

    # fc1 fused (mean-pooled embedding + numeric features + bias) as a single MXU matmul.
    h1 = jnp.dot(w1f_ref[...], xT_ref[...], preferred_element_type=jnp.float32)  # (128, Bt)
    h1 = jnp.maximum(h1, 0.0)                 # ReLU; dropout == identity in eval mode

    # fc2 on the MXU; b2 broadcast as a column. Cast keeps the bf16 MXU path when enabled.
    h2 = jnp.dot(w2_ref[...], h1.astype(w2_ref.dtype),
                 preferred_element_type=jnp.float32) + pack_ref[:, 0:1]           # (64, Bt)
    h2 = jnp.maximum(h2, 0.0)

    # fc3 (out_features == 1): VPU multiply + sublane reduce (no N=1 MXU op); b3 from pack.
    logit = jnp.sum(h2 * pack_ref[:, 1:2], axis=0, keepdims=True) + pack_ref[0:1, 2:3]

    # Lane-packed output: one (8, Bt) block per tile (row 0 carries the data; the sublane
    # broadcast keeps the store unmasked) -> ~16x less HBM writeback than a (Bt,128) store.
    out_ref[...] = jnp.broadcast_to(jax.nn.sigmoid(logit), out_ref.shape)


def prepare_kernel_params(params, seq_len, matmul_dtype=jnp.float32):
    """Fold embedding mean (1/S), fc1 split and all biases into kernel-ready arrays."""
    E = params["embedding"].shape[1]
    w1_text = params["w1"][:E]                                    # (E, 128)
    w1_num = params["w1"][E:]                                     # (F, 128)
    w1_fused = jnp.concatenate(
        [(params["embedding"] / seq_len) @ w1_text,               # row 0 (padding) stays 0
         w1_num,
         params["b1"][None, :]], axis=0)                          # ones row -> fc1 bias
    pack = jnp.stack(
        [params["b2"],
         params["w3"][:, 0],
         jnp.broadcast_to(params["b3"], params["b2"].shape)], axis=1).astype(jnp.float32)
    return {
        "w1f_T": w1_fused.T.astype(matmul_dtype),                 # (128, vocab+F+1)
        "w2_T": params["w2"].T.astype(matmul_dtype),              # (64, 128)
        "pack": pack,                                             # (64, 3)  f32
        "matmul_dtype": matmul_dtype,
    }


def review_classifier_forward(x_text_ids, x_numeric, kparams, *, batch_tile=1024):
    """Forward pass. Returns (B, 1) sigmoid probabilities."""
    B, _ = x_text_ids.shape                     # seq len already folded into w1f_T
    dtype = kparams["matmul_dtype"]
    w1f_T, w2_T, pack = kparams["w1f_T"], kparams["w2_T"], kparams["pack"]
    H1, K = w1f_T.shape                         # 128, vocab + F + 1
    H2 = w2_T.shape[0]                          # 64
    F = x_numeric.shape[1]
    vocab = K - F - 1

    # (vocab, B) integer token counts via a vectorized compare-sum (no serialized scatter).
    counts_T = (x_text_ids[None, :, :] ==
                jnp.arange(vocab, dtype=x_text_ids.dtype)[:, None, None]).sum(axis=-1)
    xT = jnp.concatenate(
        [counts_T.astype(jnp.float32),
         x_numeric.T.astype(jnp.float32),
         jnp.ones((1, B), jnp.float32)], axis=0).astype(dtype)    # (K, B)

    # Batch lives on the lane axis -> pad to a multiple of 128; pick large tiles
    # (grid-step overhead ~0.35us) but keep >= 2 grid steps for v7x's two TensorCores.
    Bp0 = _round_up(B, 128)
    Bt = _round_up(min(batch_tile, Bp0), 128)
    if Bp0 >= 256 and Bp0 <= Bt:
        Bt = _round_up(Bp0 // 2, 128)
    Bp = _round_up(Bp0, Bt)
    num_tiles = Bp // Bt
    if Bp != B:
        # Padded columns have a zero ones-row: they skip b1 and produce meaningless (but
        # finite) probabilities. They are sliced off below -- never read entries past B.
        xT = jnp.pad(xT, ((0, 0), (0, Bp - B)))

    # Explicit VMEM budget (v5e scoped default is 16 MiB; v7x physical VMEM is 64 MiB).
    itemsize = jnp.dtype(dtype).itemsize
    need = (2 * K * Bt * itemsize + 2 * 8 * Bt * 4
            + 2 * (H1 * K + H2 * H1) * itemsize + 2 * H2 * 3 * 4)
    vmem_limit = int(min(max(4 * need, 32 << 20), 64 << 20))

    out = pl.pallas_call(
        review_classifier_kernel,
        out_shape=jax.ShapeDtypeStruct((num_tiles * 8, Bt), jnp.float32),
        grid=(num_tiles,),
        in_specs=[
            pl.BlockSpec((K, Bt), lambda i: (0, i)),
            # Constant blocks: index map is (0, 0) for every grid step, so they are
            # DMA'd once and revisited (at this small size double-buffering them is
            # negligible; single-buffering only matters for huge-vocab configs).
            pl.BlockSpec((H1, K), lambda i: (0, 0)),
            pl.BlockSpec((H2, H1), lambda i: (0, 0)),
            pl.BlockSpec((H2, 3), lambda i: (0, 0)),
        ],
        out_specs=pl.BlockSpec((8, Bt), lambda i: (i, 0)),
        compiler_params=pltpu.CompilerParams(
            dimension_semantics=("parallel",),
            vmem_limit_bytes=vmem_limit),
    )(xT, w1f_T, w2_T, pack)

    probs = out.reshape(num_tiles, 8, Bt)[:, 0, :].reshape(Bp)[:B]
    return probs.reshape(B, 1)


def init_params(key, vocab_size, embedding_dim, num_numeric_features):
    """Deterministic synthetic parameters (shapes match the torch module)."""
    ks = jax.random.split(key, 7)
    E, F = embedding_dim, num_numeric_features

    emb = jax.random.normal(ks[0], (vocab_size, E), jnp.float32) * 0.1
    emb = emb.at[0].set(0.0)                              # padding_idx=0 row is zero

    def linear(kw, kb, fan_in, fan_out):
        bound = 1.0 / float(fan_in) ** 0.5
        w = jax.random.uniform(kw, (fan_in, fan_out), jnp.float32, -bound, bound)
        b = jax.random.uniform(kb, (fan_out,), jnp.float32, -bound, bound)
        return w, b

    w1, b1 = linear(ks[1], ks[2], E + F, 128)             # fc1: (E+F) -> 128
    w2, b2 = linear(ks[3], ks[4], 128, 64)                # fc2: 128 -> 64
    w3, b3 = linear(ks[5], ks[6], 64, 1)                  # fc3: 64 -> 1

    return {"embedding": emb, "w1": w1, "b1": b1, "w2": w2, "b2": b2, "w3": w3, "b3": b3}


if __name__ == "__main__":
    vocab_size, embedding_dim, num_numeric_features = 50, 32, 4
    batch, seq = 8, 8

    key = jax.random.PRNGKey(0)
    k_par, k_ids, k_num = jax.random.split(key, 3)

    params = init_params(k_par, vocab_size, embedding_dim, num_numeric_features)
    x_text = jax.random.randint(k_ids, (batch, seq), 0, vocab_size, dtype=jnp.int32)
    x_numeric = jax.random.normal(k_num, (batch, num_numeric_features), jnp.float32)

    # Pure-JAX reference with the original gather -> mean -> concat -> MLP semantics.
    emb = jnp.take(params["embedding"], x_text, axis=0)
    x = jnp.concatenate([jnp.mean(emb, axis=1), x_numeric], axis=1)
    h1 = jnp.maximum(x @ params["w1"] + params["b1"], 0.0)
    h2 = jnp.maximum(h1 @ params["w2"] + params["b2"], 0.0)
    ref = jax.nn.sigmoid(h2 @ params["w3"] + params["b3"])

    # f32 MXU operands (exact path).
    kp32 = prepare_kernel_params(params, seq, matmul_dtype=jnp.float32)
    out32 = jax.block_until_ready(review_classifier_forward(x_text, x_numeric, kp32))
    assert out32.shape == (batch, 1)
    assert jnp.allclose(out32, ref, atol=1e-4), "f32 kernel mismatch vs reference"

    # bf16 MXU operands (v6e/v7x fast path), f32 accumulation -> looser tolerance.
    kpbf = prepare_kernel_params(params, seq, matmul_dtype=jnp.bfloat16)
    outbf = jax.block_until_ready(review_classifier_forward(x_text, x_numeric, kpbf))
    assert outbf.shape == (batch, 1)
    assert jnp.allclose(outbf, ref, atol=2e-2), "bf16 kernel mismatch vs reference"

    print("KERNEL_OK")
</pallas_src>

<mosaic_0001>
module attributes {stable_mosaic.version = 11 : i64} {
  func.func @review_classifier_kernel(%arg0: i32, %arg1: memref<55x128xf32, #tpu.memory_space<vmem>>, %arg2: memref<128x55xf32, #tpu.memory_space<vmem>>, %arg3: memref<64x128xf32, #tpu.memory_space<vmem>>, %arg4: memref<64x3xf32, #tpu.memory_space<vmem>>, %arg5: memref<8x128xf32, #tpu.memory_space<vmem>>) attributes {dimension_semantics = [#tpu.dimension_semantics<parallel>], iteration_bounds = array<i64: 1>, scalar_prefetch = 0 : i64, scratch_operands = 0 : i64, tpu.core_type = #tpu.core_type<tc>, window_params = [{transform_indices = @transform_0, window_bounds = array<i64: 55, 128>}, {pipeline_mode = #tpu.pipeline_mode<synchronous>, transform_indices = @transform_1, window_bounds = array<i64: 128, 55>}, {pipeline_mode = #tpu.pipeline_mode<synchronous>, transform_indices = @transform_2, window_bounds = array<i64: 64, 128>}, {pipeline_mode = #tpu.pipeline_mode<synchronous>, transform_indices = @transform_3, window_bounds = array<i64: 64, 3>}, {transform_indices = @transform_4, window_bounds = array<i64: 8, 128>}]} {
    %c0 = arith.constant 0 : index
    %c0_0 = arith.constant 0 : index
    %0 = vector.load %arg2[%c0, %c0_0] : memref<128x55xf32, #tpu.memory_space<vmem>>, vector<128x55xf32>
    %c0_1 = arith.constant 0 : index
    %c0_2 = arith.constant 0 : index
    %1 = vector.load %arg1[%c0_1, %c0_2] : memref<55x128xf32, #tpu.memory_space<vmem>>, vector<55x128xf32>
    %cst = arith.constant dense<0.000000e+00> : vector<128x128xf32>
    %2 = tpu.matmul %0, %1, %cst {dimension_numbers = #tpu.dot_dimension_numbers<[1], [0], [0], [1], [0, 0, 1, 1], [], []>} : vector<128x55xf32>, vector<55x128xf32>, vector<128x128xf32> -> vector<128x128xf32>
    %cst_3 = arith.constant 0.000000e+00 : f32
    %3 = vector.broadcast %cst_3 : f32 to vector<128x128xf32>
    %4 = arith.maximumf %2, %3 : vector<128x128xf32>
    %c0_4 = arith.constant 0 : index
    %c0_5 = arith.constant 0 : index
    %5 = vector.load %arg3[%c0_4, %c0_5] : memref<64x128xf32, #tpu.memory_space<vmem>>, vector<64x128xf32>
    %cst_6 = arith.constant dense<0.000000e+00> : vector<64x128xf32>
    %6 = tpu.matmul %5, %4, %cst_6 {dimension_numbers = #tpu.dot_dimension_numbers<[1], [0], [0], [1], [0, 0, 1, 1], [], []>} : vector<64x128xf32>, vector<128x128xf32>, vector<64x128xf32> -> vector<64x128xf32>
    %c0_7 = arith.constant 0 : index
    %c0_8 = arith.constant 0 : index
    %7 = vector.load %arg4[%c0_7, %c0_8] : memref<64x3xf32, #tpu.memory_space<vmem>>, vector<64x1xf32>
    %8 = vector.broadcast %7 : vector<64x1xf32> to vector<64x128xf32>
    %9 = arith.addf %6, %8 : vector<64x128xf32>
    %cst_9 = arith.constant 0.000000e+00 : f32
    %10 = vector.broadcast %cst_9 : f32 to vector<64x128xf32>
    %11 = arith.maximumf %9, %10 : vector<64x128xf32>
    %c0_10 = arith.constant 0 : index
    %c1 = arith.constant 1 : index
    %12 = vector.load %arg4[%c0_10, %c1] : memref<64x3xf32, #tpu.memory_space<vmem>>, vector<64x1xf32>
    %13 = vector.broadcast %12 : vector<64x1xf32> to vector<64x128xf32>
    %14 = arith.mulf %11, %13 : vector<64x128xf32>
    %cst_11 = arith.constant dense<0.000000e+00> : vector<128xf32>
    %15 = vector.multi_reduction <add>, %14, %cst_11 [0] : vector<64x128xf32> to vector<128xf32>
    %16 = vector.shape_cast %15 : vector<128xf32> to vector<1x128xf32>
    %c0_12 = arith.constant 0 : index
    %c2 = arith.constant 2 : index
    %17 = vector.load %arg4[%c0_12, %c2] : memref<64x3xf32, #tpu.memory_space<vmem>>, vector<1x1xf32>
    %18 = vector.broadcast %17 : vector<1x1xf32> to vector<1x128xf32>
    %19 = arith.addf %16, %18 : vector<1x128xf32>
    %20 = arith.negf %19 : vector<1x128xf32>
    %21 = math.exp %20 : vector<1x128xf32>
    %cst_13 = arith.constant 1.000000e+00 : f32
    %22 = vector.broadcast %cst_13 : f32 to vector<1x128xf32>
    %23 = arith.addf %22, %21 : vector<1x128xf32>
    %24 = arith.divf %22, %23 : vector<1x128xf32>
    %25 = vector.shape_cast %24 : vector<1x128xf32> to vector<1x128xf32>
    %26 = vector.broadcast %25 : vector<1x128xf32> to vector<8x128xf32>
    %c0_14 = arith.constant 0 : index
    %c0_15 = arith.constant 0 : index
    %27 = vector.load %arg5[%c0_14, %c0_15] : memref<8x128xf32, #tpu.memory_space<vmem>>, vector<8x128xf32>
    tpu.vector_store %arg5[%c0_14, %c0_15], %26 {strides = array<i32>} : memref<8x128xf32, #tpu.memory_space<vmem>>, vector<8x128xf32>,
    return
  }
  func.func @transform_0(%arg0: i32) -> (i32, i32) {
    %c0_i32 = arith.constant 0 : i32
    %c0_i32_0 = arith.constant 0 : i32
    return %c0_i32, %arg0 : i32, i32
  }
  func.func @transform_1(%arg0: i32) -> (i32, i32) {
    %c0_i32 = arith.constant 0 : i32
    %c0_i32_0 = arith.constant 0 : i32
    %c0_i32_1 = arith.constant 0 : i32
    return %c0_i32, %c0_i32_0 : i32, i32
  }
  func.func @transform_2(%arg0: i32) -> (i32, i32) {
    %c0_i32 = arith.constant 0 : i32
    %c0_i32_0 = arith.constant 0 : i32
    %c0_i32_1 = arith.constant 0 : i32
    return %c0_i32, %c0_i32_0 : i32, i32
  }
  func.func @transform_3(%arg0: i32) -> (i32, i32) {
    %c0_i32 = arith.constant 0 : i32
    %c0_i32_0 = arith.constant 0 : i32
    %c0_i32_1 = arith.constant 0 : i32
    return %c0_i32, %c0_i32_0 : i32, i32
  }
  func.func @transform_4(%arg0: i32) -> (i32, i32) {
    %c0_i32 = arith.constant 0 : i32
    %c0_i32_0 = arith.constant 0 : i32
    return %arg0, %c0_i32 : i32, i32
  }
}

</mosaic_0001>

<llo_original>
// kernel: tpu_custom_call.1
$region0: #{tpu_custom_call.1}
  #allocation0 [shape = 'u32[]', space=smem, size = 0x4, offset = 0x4, fixed_abs, tag = 'smem constant byte address 0x4 - core index']
  #allocation1 [shape = 'u32[72,128]{1,0:T(1,128)}', space=vmem, size = 0x9000, scoped, tag = 'internal scratch']
  %s0 = inlined_call_operand.vmem [shape: f32[55,128], index: 0, kind: input, shape index: {}]
  %s1 = inlined_call_operand.vmem [shape: f32[128,55], index: 1, kind: input, shape index: {}]
  %s2 = inlined_call_operand.vmem [shape: f32[64,128], index: 2, kind: input, shape index: {}]
  %s3 = inlined_call_operand.vmem [shape: f32[64,3], index: 3, kind: input, shape index: {}]
  %s4 = inlined_call_operand.hbm [shape: f32[8,128], index: 4, kind: output, shape index: {}]
  %s5 = sld [smem:[#allocation0]]
  $region26: #{tpu_custom_call.1} parent=0
    _
  %s7 = ssub.s32 1, %s5
  %s8 = scalar_select 0, %s7, %s5
  $region1: #{tpu_custom_call.1} parent=0
    #allocation2 [shape = 'u8[4096]{0}', space=vmem, size = 0x1000, scoped, tag = 'output window, operand 0, single buffered']
    #allocation3 [shape = 's32[1]{0}', space=sflag, size = 0x4, scoped, tag = 'scoped memory for tpu_custom_call.1']
    %9 = vsyncpa [#allocation3], 0
    // Predicated region
    $region2: #{tpu_custom_call.1} parent=1 // pred_check
      _
    $region3: #{tpu_custom_call.1} parent=1 // pred_check_branch
      %11 = sbr.rel (0) target = $region5
    $region4: #{tpu_custom_call.1} parent=1 // pred_region
      _
    $region5: #{tpu_custom_call.1} parent=1 // pred_fallthru
      _
    // Predicated region
    $region6: #{tpu_custom_call.1} parent=1 // pred_check
      _
    $region7: #{tpu_custom_call.1} parent=1 // pred_check_branch
      %13 = sbr.rel (0) target = $region9
    $region8: #{tpu_custom_call.1} parent=1 // pred_region
      _
    $region9: #{tpu_custom_call.1} parent=1 // pred_fallthru
      _
    // Predicated region
    $region10: #{tpu_custom_call.1} parent=1 // pred_check
      _
    $region11: #{tpu_custom_call.1} parent=1 // pred_check_branch
      %15 = sbr.rel (0) target = $region13
    $region12: #{tpu_custom_call.1} parent=1 // pred_region
      _
    $region13: #{tpu_custom_call.1} parent=1 // pred_fallthru
      _
    // Predicated region
    $region14: #{tpu_custom_call.1} parent=1 // pred_check
      _
    $region15: #{tpu_custom_call.1} parent=1 // pred_check_branch
      %17 = sbr.rel (0) target = $region17
    $region16: #{tpu_custom_call.1} parent=1 // pred_region
      _
    $region17: #{tpu_custom_call.1} parent=1 // pred_fallthru
      _
    %v18 = vld [vmem:[%s1] sm:$0xff]
    %v19 = vld [vmem:[%s1 + $0x8] sm:$0xff]
    %v20 = vld [vmem:[%s1 + $0x10] sm:$0xff]
    %v21 = vld [vmem:[%s1 + $0x18] sm:$0xff]
    %v22 = vld [vmem:[%s1 + $0x20] sm:$0xff]
    %v23 = vld [vmem:[%s1 + $0x28] sm:$0xff]
    %v24 = vld [vmem:[%s1 + $0x30] sm:$0xff]
    %v25 = vld [vmem:[%s1 + $0x38] sm:$0xff]
    %v26 = vld [vmem:[%s1 + $0x40] sm:$0xff]
    %v27 = vld [vmem:[%s1 + $0x48] sm:$0xff]
    %v28 = vld [vmem:[%s1 + $0x50] sm:$0xff]
    %v29 = vld [vmem:[%s1 + $0x58] sm:$0xff]
    %v30 = vld [vmem:[%s1 + $0x60] sm:$0xff]
    %v31 = vld [vmem:[%s1 + $0x68] sm:$0xff]
    %v32 = vld [vmem:[%s1 + $0x70] sm:$0xff]
    %v33 = vld [vmem:[%s1 + $0x78] sm:$0xff]
    %v34 = vld [vmem:[%s0] sm:$0xff]
    %v35 = vld [vmem:[%s0 + $0x8] sm:$0xff]
    %v36 = vld [vmem:[%s0 + $0x10] sm:$0xff]
    %v37 = vld [vmem:[%s0 + $0x18] sm:$0xff]
    %v38 = vld [vmem:[%s0 + $0x20] sm:$0xff]
    %v39 = vld [vmem:[%s0 + $0x28] sm:$0xff]
    %v40 = vld [vmem:[%s0 + $0x30] sm:$0x7f]
    %vm41 = vcmask 449536
    %v43 = vsel %vm41, %v18, 0
    %v46 = vsel %vm41, %v19, 0
    %v49 = vsel %vm41, %v20, 0
    %v52 = vsel %vm41, %v21, 0
    %v55 = vsel %vm41, %v22, 0
    %v58 = vsel %vm41, %v23, 0
    %v61 = vsel %vm41, %v24, 0
    %v64 = vsel %vm41, %v25, 0
    %v67 = vsel %vm41, %v26, 0
    %v70 = vsel %vm41, %v27, 0
    %v73 = vsel %vm41, %v28, 0
    %v76 = vsel %vm41, %v29, 0
    %v79 = vsel %vm41, %v30, 0
    %v82 = vsel %vm41, %v31, 0
    %v85 = vsel %vm41, %v32, 0
    %v88 = vsel %vm41, %v33, 0
    %vm90 = vcmask 1046528
    %v92 = vsel %vm90, %v40, 0
    %94 = vmatpush.msra.mxu0 0.0
    %95 = vmatpush.msra.mxu0 0.0
    %96 = vmatpush.msra.mxu0 0.0
    %97 = vmatpush.msra.mxu0 0.0
    %98 = vmatpush.msra.mxu0 0.0
    %99 = vmatpush.msra.mxu0 0.0
    %100 = vmatpush.msra.mxu0 0.0
    %101 = vmatpush.msra.mxu0 0.0
    %102 = vmatpush.msra.mxu0 0.0
    %103 = vmatpush.msra.mxu0 %v92
    %104 = vmatpush.msra.mxu0 %v39
    %105 = vmatpush.msra.mxu0 %v38
    %106 = vmatpush.msra.mxu0 %v37
    %107 = vmatpush.msra.mxu0 %v36
    %108 = vmatpush.msra.mxu0 %v35
    %109 = vmatpush.msra.mxu0 %v34
    %110 = vmatmul.f32.gmra.mxu0 %v43
    %v111 = vpop.f32.mrf.mxu0
    %v112 = vadd.f32 0.0, %v111
    %113 = vmatmul.f32.gmra.mxu0 %v46
    %v114 = vpop.f32.mrf.mxu0
    %v115 = vadd.f32 0.0, %v114
    %116 = vmatmul.f32.gmra.mxu0 %v49
    %v117 = vpop.f32.mrf.mxu0
    %v118 = vadd.f32 0.0, %v117
    %119 = vmatmul.f32.gmra.mxu0 %v52
    %v120 = vpop.f32.mrf.mxu0
    %v121 = vadd.f32 0.0, %v120
    %122 = vmatmul.f32.gmra.mxu0 %v55
    %v123 = vpop.f32.mrf.mxu0
    %v124 = vadd.f32 0.0, %v123
    %125 = vmatmul.f32.gmra.mxu0 %v58
    %v126 = vpop.f32.mrf.mxu0
    %v127 = vadd.f32 0.0, %v126
    %128 = vmatmul.f32.gmra.mxu0 %v61
    %v129 = vpop.f32.mrf.mxu0
    %v130 = vadd.f32 0.0, %v129
    %131 = vmatmul.f32.gmra.mxu0 %v64
    %v132 = vpop.f32.mrf.mxu0
    %v133 = vadd.f32 0.0, %v132
    %134 = vmatmul.f32.gmra.mxu0 %v67
    %v135 = vpop.f32.mrf.mxu0
    %v136 = vadd.f32 0.0, %v135
    %137 = vmatmul.f32.gmra.mxu0 %v70
    %v138 = vpop.f32.mrf.mxu0
    %v139 = vadd.f32 0.0, %v138
    %140 = vmatmul.f32.gmra.mxu0 %v73
    %v141 = vpop.f32.mrf.mxu0
    %v142 = vadd.f32 0.0, %v141
    %143 = vmatmul.f32.gmra.mxu0 %v76
    %v144 = vpop.f32.mrf.mxu0
    %v145 = vadd.f32 0.0, %v144
    %146 = vmatmul.f32.gmra.mxu0 %v79
    %v147 = vpop.f32.mrf.mxu0
    %v148 = vadd.f32 0.0, %v147
    %149 = vmatmul.f32.gmra.mxu0 %v82
    %v150 = vpop.f32.mrf.mxu0
    %v151 = vadd.f32 0.0, %v150
    %152 = vmatmul.f32.gmra.mxu0 %v85
    %v153 = vpop.f32.mrf.mxu0
    %v154 = vadd.f32 0.0, %v153
    %155 = vmatmul.f32.gmra.mxu0 %v88
    %v156 = vpop.f32.mrf.mxu0
    %v157 = vadd.f32 0.0, %v156
    %158 = vdwg.mxu0
    %v159 = vmax.f32 %v112, 0.0
    %v160 = vmax.f32 %v115, 0.0
    %v161 = vmax.f32 %v118, 0.0
    %v162 = vmax.f32 %v121, 0.0
    %v163 = vmax.f32 %v124, 0.0
    %v164 = vmax.f32 %v127, 0.0
    %v165 = vmax.f32 %v130, 0.0
    %v166 = vmax.f32 %v133, 0.0
    %v167 = vmax.f32 %v136, 0.0
    %v168 = vmax.f32 %v139, 0.0
    %v169 = vmax.f32 %v142, 0.0
    %v170 = vmax.f32 %v145, 0.0
    %v171 = vmax.f32 %v148, 0.0
    %v172 = vmax.f32 %v151, 0.0
    %v173 = vmax.f32 %v154, 0.0
    %v174 = vmax.f32 %v157, 0.0
    %v175 = vld [vmem:[%s2] sm:$0xff]
    %v176 = vld [vmem:[%s2 + $0x8] sm:$0xff]
    %v177 = vld [vmem:[%s2 + $0x10] sm:$0xff]
    %v178 = vld [vmem:[%s2 + $0x18] sm:$0xff]
    %v179 = vld [vmem:[%s2 + $0x20] sm:$0xff]
    %v180 = vld [vmem:[%s2 + $0x28] sm:$0xff]
    %v181 = vld [vmem:[%s2 + $0x30] sm:$0xff]
    %v182 = vld [vmem:[%s2 + $0x38] sm:$0xff]
    %v183 = vld [vmem:[%s3] sm:$0xff]
    %v184 = vld [vmem:[%s3 + $0x8] sm:$0xff]
    %v185 = vld [vmem:[%s3 + $0x10] sm:$0xff]
    %v186 = vld [vmem:[%s3 + $0x18] sm:$0xff]
    %v187 = vld [vmem:[%s3 + $0x20] sm:$0xff]
    %v188 = vld [vmem:[%s3 + $0x28] sm:$0xff]
    %v189 = vld [vmem:[%s3 + $0x30] sm:$0xff]
    %v190 = vld [vmem:[%s3 + $0x38] sm:$0xff]
    %192 = vset.pattern.permute.xlu0 0
    %193 = vperm.xlu0 %192, %v183
    %v194 = vpop.permute.xlu0 %193
    %197 = vset.pattern.permute.xlu0 0
    %198 = vperm.xlu0 %197, %v184
    %v199 = vpop.permute.xlu0 %198
    %202 = vset.pattern.permute.xlu0 0
    %203 = vperm.xlu0 %202, %v185
    %v204 = vpop.permute.xlu0 %203
    %207 = vset.pattern.permute.xlu0 0
    %208 = vperm.xlu0 %207, %v186
    %v209 = vpop.permute.xlu0 %208
    %212 = vset.pattern.permute.xlu0 0
    %213 = vperm.xlu0 %212, %v187
    %v214 = vpop.permute.xlu0 %213
    %217 = vset.pattern.permute.xlu0 0
    %218 = vperm.xlu0 %217, %v188
    %v219 = vpop.permute.xlu0 %218
    %222 = vset.pattern.permute.xlu0 0
    %223 = vperm.xlu0 %222, %v189
    %v224 = vpop.permute.xlu0 %223
    %227 = vset.pattern.permute.xlu0 0
    %228 = vperm.xlu0 %227, %v190
    %v229 = vpop.permute.xlu0 %228
    %231 = vmatpush.msra.mxu0 %v174
    %232 = vmatpush.msra.mxu0 %v173
    %233 = vmatpush.msra.mxu0 %v172
    %234 = vmatpush.msra.mxu0 %v171
    %235 = vmatpush.msra.mxu0 %v170
    %236 = vmatpush.msra.mxu0 %v169
    %237 = vmatpush.msra.mxu0 %v168
    %238 = vmatpush.msra.mxu0 %v167
    %239 = vmatpush.msra.mxu0 %v166
    %240 = vmatpush.msra.mxu0 %v165
    %241 = vmatpush.msra.mxu0 %v164
    %242 = vmatpush.msra.mxu0 %v163
    %243 = vmatpush.msra.mxu0 %v162
    %244 = vmatpush.msra.mxu0 %v161
    %245 = vmatpush.msra.mxu0 %v160
    %246 = vmatpush.msra.mxu0 %v159
    %247 = vmatmul.f32.gmra.mxu0 %v175
    %v248 = vpop.f32.mrf.mxu0
    %v249 = vadd.f32 %v194, %v248
    %250 = vmatmul.f32.gmra.mxu0 %v176
    %v251 = vpop.f32.mrf.mxu0
    %v252 = vadd.f32 %v199, %v251
    %253 = vmatmul.f32.gmra.mxu0 %v177
    %v254 = vpop.f32.mrf.mxu0
    %v255 = vadd.f32 %v204, %v254
    %256 = vmatmul.f32.gmra.mxu0 %v178
    %v257 = vpop.f32.mrf.mxu0
    %v258 = vadd.f32 %v209, %v257
    %259 = vmatmul.f32.gmra.mxu0 %v179
    %v260 = vpop.f32.mrf.mxu0
    %v261 = vadd.f32 %v214, %v260
    %262 = vmatmul.f32.gmra.mxu0 %v180
    %v263 = vpop.f32.mrf.mxu0
    %v264 = vadd.f32 %v219, %v263
    %265 = vmatmul.f32.gmra.mxu0 %v181
    %v266 = vpop.f32.mrf.mxu0
    %v267 = vadd.f32 %v224, %v266
    %268 = vmatmul.f32.gmra.mxu0 %v182
    %v269 = vpop.f32.mrf.mxu0
    %v270 = vadd.f32 %v229, %v269
    %271 = vdwg.mxu0
    %v272 = vmax.f32 %v249, 0.0
    %v273 = vmax.f32 %v252, 0.0
    %v274 = vmax.f32 %v255, 0.0
    %v275 = vmax.f32 %v258, 0.0
    %v276 = vmax.f32 %v261, 0.0
    %v277 = vmax.f32 %v264, 0.0
    %v278 = vmax.f32 %v267, 0.0
    %v279 = vmax.f32 %v270, 0.0
    %280 = vset.pattern.permute.xlu0 1
    %281 = vperm.xlu0 %280, %v183
    %v282 = vpop.permute.xlu0 %281
    %284 = vset.pattern.permute.xlu0 1
    %285 = vperm.xlu0 %284, %v184
    %v286 = vpop.permute.xlu0 %285
    %288 = vset.pattern.permute.xlu0 1
    %289 = vperm.xlu0 %288, %v185
    %v290 = vpop.permute.xlu0 %289
    %292 = vset.pattern.permute.xlu0 1
    %293 = vperm.xlu0 %292, %v186
    %v294 = vpop.permute.xlu0 %293
    %296 = vset.pattern.permute.xlu0 1
    %297 = vperm.xlu0 %296, %v187
    %v298 = vpop.permute.xlu0 %297
    %300 = vset.pattern.permute.xlu0 1
    %301 = vperm.xlu0 %300, %v188
    %v302 = vpop.permute.xlu0 %301
    %304 = vset.pattern.permute.xlu0 1
    %305 = vperm.xlu0 %304, %v189
    %v306 = vpop.permute.xlu0 %305
    %308 = vset.pattern.permute.xlu0 1
    %309 = vperm.xlu0 %308, %v190
    %v310 = vpop.permute.xlu0 %309
    %v312 = vmul.f32 %v272, %v282
    %v313 = vmul.f32 %v273, %v286
    %v314 = vmul.f32 %v274, %v290
    %v315 = vmul.f32 %v275, %v294
    %v316 = vmul.f32 %v276, %v298
    %v317 = vmul.f32 %v277, %v302
    %v318 = vmul.f32 %v278, %v306
    %v319 = vmul.f32 %v279, %v310
    %v320 = vadd.f32 %v312, %v313
    %v321 = vadd.f32 %v320, %v314
    %v322 = vadd.f32 %v321, %v315
    %v323 = vadd.f32 %v322, %v316
    %v324 = vadd.f32 %v323, %v317
    %v325 = vadd.f32 %v324, %v318
    %v326 = vadd.f32 %v325, %v319
    %v327 = vrot.slane %v326, 4
    %v328 = vadd.f32 %v326, %v327
    %v329 = vrot.slane %v328, 2
    %v330 = vadd.f32 %v328, %v329
    %v331 = vrot.slane %v330, 1
    %v332 = vadd.f32 %v330, %v331
    %v333 = vld [vmem:[%s3] sm:$0x1]
    %335 = vset.pattern.permute.xlu0 2
    %336 = vperm.xlu0 %335, %v333
    %v337 = vpop.permute.xlu0 %336
    %v339 = vadd.f32 %v332, %v337
    %v340 = vxor.u32 %v339, 2147483648
    %v341 = vmul.f32 %v340, 1.442695
    %v342 = vpow.pop %v341
    %v343 = vadd.f32 %v342, 1.0
    %v344 = vrcp.pop %v343
    %v345 = vmul.f32 %v343, %v344
    %v346 = vsub.f32 1.0, %v345
    %v347 = vmul.f32 %v344, %v346
    %v348 = vadd.f32 %v344, %v347
    %vm349 = vweird.f32 %v343
    %vm350 = vweird.f32 %v344
    %vm351 = vmor %vm349, %vm350
    %v352 = vsel %vm351, %v344, %v348
    %v353 = vand.u32 2147483647, %v343
    %vm354 = vcmp.eq.f32.partialorder %v353, 8.507059e+37
    %v355 = vand.u32 %v343, 2147483648
    %v356 = vor.u32 1.1754944e-38, %v355
    %v357 = vsel %vm354, %v356, %v352
    %v358 = vmul.f32 1.0, %v357
    %v359 = vperm.slane %v358, 0
    %360 = vst [vmem:[#allocation2] sm:$0xff] %v359
    // Predicated region
    $region18: #{tpu_custom_call.1} parent=1 // pred_check
      _
    $region19: #{tpu_custom_call.1} parent=1 // pred_check_branch
      %362 = sbr.rel (0) target = $region21
    $region20: #{tpu_custom_call.1} parent=1 // pred_region
      %364 = vsyncadd [#allocation3], 0
      %s366 = sshll.u32 [#allocation2], 4
      %s367 = int_to_ptr.vmem [resolvable:$true] %s366
      %s368 = sshll.u32 %s4, 4
      %s369 = int_to_ptr.hbm [resolvable:$true] %s368
      %371 = dma.vmem_to_hbm [thread:$0]  %s367, 128, %s369, [#allocation3]
    $region21: #{tpu_custom_call.1} parent=1 // pred_fallthru
      _
    // Predicated region
    $region22: #{tpu_custom_call.1} parent=1 // pred_check
      _
    $region23: #{tpu_custom_call.1} parent=1 // pred_check_branch
      %373 = sbr.rel (0) target = $region25
    $region24: #{tpu_custom_call.1} parent=1 // pred_region
      %375 = dma.done [#allocation3], 128
    $region25: #{tpu_custom_call.1} parent=1 // pred_fallthru
      _
    %376 = vsyncpa [#allocation3], 1

</llo_original>
